<compile_context>
chip_gen: v7x
topology: tpu7x:2x2x1
jax: 0.10.0
libtpu: 0.0.40
codegen_flags: <defaults>
</compile_context>

<pallas_src>
import functools

import jax
import jax.numpy as jnp
from jax.experimental import pallas as pl
from jax.experimental.pallas import tpu as pltpu

# ----------------------------- small, module-consistent shapes -----------------------
B = 2          # batch
A = 8          # number of attribute heads (len(attribute_feat))
D = 32         # hidden_dim
NORM_EPS = 1e-12   # F.normalize default eps


# ----------------------------- Pallas kernel -----------------------------------------
def attribute_attention_kernel(a_ref, x_ref, o_ref):
    """Fused attribute-attention pooling for the whole batch in one invocation.

    a_ref: (B, A, D) raw attribute head embeddings (stacked, unnormalized)
    x_ref: (B, D)    raw query embedding
    o_ref: (B, D)    attention-pooled output
    """
    a = a_ref[...]
    x = x_ref[...]

    # F.normalize(v, dim=-1): v / max(||v||_2, eps)
    a_norm = jnp.sqrt(jnp.sum(a * a, axis=-1, keepdims=True))
    a_n = a / jnp.maximum(a_norm, NORM_EPS)                       # (B, A, D)

    x_norm = jnp.sqrt(jnp.sum(x * x, axis=-1, keepdims=True))
    x_n = x / jnp.maximum(x_norm, NORM_EPS)                       # (B, D)

    # scores[b, i] = <a_n[b, i, :], x_n[b, :]>   == bmm(a, l2_x.unsqueeze(2))
    scores = jnp.sum(a_n * x_n[:, None, :], axis=-1)              # (B, A)

    # softmax over the attribute-head axis (torch dim=1 == last axis here)
    s = scores - jnp.max(scores, axis=-1, keepdims=True)
    p = jnp.exp(s)
    attn = p / jnp.sum(p, axis=-1, keepdims=True)                 # (B, A)

    # out[b, d] = sum_i attn[b, i] * a_n[b, i, d]  == bmm(a^T, ab).squeeze()
    o_ref[...] = jnp.sum(a_n * attn[:, :, None], axis=1)          # (B, D)


# ----------------------------- wrapper ------------------------------------------------
@jax.jit
def meta_graph1_forward(x, attribute_feat):
    """x: (B, D); attribute_feat: list of A arrays, each (B, D). Returns (B, D)."""
    # torch.stack([...], dim=1) -> (B, A, D); normalization is done inside the kernel.
    a = jnp.stack(attribute_feat, axis=1)
    b_, a_, d_ = a.shape

    vmem = pl.BlockSpec(memory_space=pltpu.MemorySpace.VMEM)
    return pl.pallas_call(
        attribute_attention_kernel,
        out_shape=jax.ShapeDtypeStruct((b_, d_), x.dtype),
        in_specs=[vmem, vmem],     # whole arrays resident in VMEM, no grid, no HBM re-reads
        out_specs=vmem,
    )(a, x)


# ----------------------------- pure-JAX reference -------------------------------------
def _reference(x, attribute_feat):
    def nrm(v):
        return v / jnp.maximum(jnp.linalg.norm(v, axis=-1, keepdims=True), NORM_EPS)

    a = jnp.stack([nrm(f) for f in attribute_feat], axis=1)       # (B, A, D)
    xn = nrm(x)                                                   # (B, D)
    scores = jnp.einsum("bad,bd->ba", a, xn)                      # (B, A)
    attn = jax.nn.softmax(scores, axis=-1)                        # (B, A)
    return jnp.einsum("bad,ba->bd", a, attn)                      # (B, D)


# ----------------------------- main ----------------------------------------------------
if __name__ == "__main__":
    key = jax.random.PRNGKey(0)
    kx, ka = jax.random.split(key)

    x = jax.random.normal(kx, (B, D), jnp.float32)
    att_keys = jax.random.split(ka, A)
    attribute_feat = [jax.random.normal(k, (B, D), jnp.float32) for k in att_keys]

    out = jax.block_until_ready(meta_graph1_forward(x, attribute_feat))

    assert out.shape == (B, D), out.shape
    assert bool(jnp.all(jnp.isfinite(out)))

    expected = _reference(x, attribute_feat)
    assert jnp.allclose(out, expected, atol=1e-5, rtol=1e-5), (
        float(jnp.max(jnp.abs(out - expected))))

    print("KERNEL_OK")
</pallas_src>

<mosaic_0001>
module attributes {stable_mosaic.version = 11 : i64} {
  func.func @attribute_attention_kernel(%arg0: memref<2x8x32xf32, #tpu.memory_space<vmem>>, %arg1: memref<2x32xf32, #tpu.memory_space<vmem>>, %arg2: memref<2x32xf32, #tpu.memory_space<vmem>>) attributes {dimension_semantics = [], scalar_prefetch = 0 : i64, scratch_operands = 0 : i64, tpu.core_type = #tpu.core_type<tc>} {
    %c0 = arith.constant 0 : index
    %c0_0 = arith.constant 0 : index
    %c0_1 = arith.constant 0 : index
    %0 = vector.load %arg0[%c0, %c0_0, %c0_1] : memref<2x8x32xf32, #tpu.memory_space<vmem>>, vector<2x8x32xf32>
    %c0_2 = arith.constant 0 : index
    %c0_3 = arith.constant 0 : index
    %1 = vector.load %arg1[%c0_2, %c0_3] : memref<2x32xf32, #tpu.memory_space<vmem>>, vector<2x32xf32>
    %2 = arith.mulf %0, %0 : vector<2x8x32xf32>
    %cst = arith.constant dense<0.000000e+00> : vector<2x8xf32>
    %3 = vector.multi_reduction <add>, %2, %cst [2] : vector<2x8x32xf32> to vector<2x8xf32>
    %4 = vector.shape_cast %3 : vector<2x8xf32> to vector<2x8x1xf32>
    %5 = math.sqrt %4 : vector<2x8x1xf32>
    %cst_4 = arith.constant 9.99999996E-13 : f32
    %6 = vector.broadcast %cst_4 : f32 to vector<2x8x1xf32>
    %7 = arith.maximumf %5, %6 : vector<2x8x1xf32>
    %8 = vector.broadcast %7 : vector<2x8x1xf32> to vector<2x8x32xf32>
    %9 = arith.divf %0, %8 : vector<2x8x32xf32>
    %10 = arith.mulf %1, %1 : vector<2x32xf32>
    %cst_5 = arith.constant dense<0.000000e+00> : vector<2xf32>
    %11 = vector.multi_reduction <add>, %10, %cst_5 [1] : vector<2x32xf32> to vector<2xf32>
    %12 = vector.shape_cast %11 : vector<2xf32> to vector<2x1xf32>
    %13 = math.sqrt %12 : vector<2x1xf32>
    %cst_6 = arith.constant 9.99999996E-13 : f32
    %14 = vector.broadcast %cst_6 : f32 to vector<2x1xf32>
    %15 = arith.maximumf %13, %14 : vector<2x1xf32>
    %16 = vector.broadcast %15 : vector<2x1xf32> to vector<2x32xf32>
    %17 = arith.divf %1, %16 : vector<2x32xf32>
    %18 = vector.shape_cast %17 : vector<2x32xf32> to vector<2x1x32xf32>
    %19 = vector.broadcast %18 : vector<2x1x32xf32> to vector<2x8x32xf32>
    %20 = arith.mulf %9, %19 : vector<2x8x32xf32>
    %cst_7 = arith.constant dense<0.000000e+00> : vector<2x8xf32>
    %21 = vector.multi_reduction <add>, %20, %cst_7 [2] : vector<2x8x32xf32> to vector<2x8xf32>
    %cst_8 = arith.constant dense<0xFF800000> : vector<2xf32>
    %22 = vector.multi_reduction <maximumf>, %21, %cst_8 [1] : vector<2x8xf32> to vector<2xf32>
    %23 = vector.shape_cast %22 : vector<2xf32> to vector<2x1xf32>
    %24 = vector.broadcast %23 : vector<2x1xf32> to vector<2x8xf32>
    %25 = arith.subf %21, %24 : vector<2x8xf32>
    %26 = math.exp %25 : vector<2x8xf32>
    %cst_9 = arith.constant dense<0.000000e+00> : vector<2xf32>
    %27 = vector.multi_reduction <add>, %26, %cst_9 [1] : vector<2x8xf32> to vector<2xf32>
    %28 = vector.shape_cast %27 : vector<2xf32> to vector<2x1xf32>
    %29 = vector.broadcast %28 : vector<2x1xf32> to vector<2x8xf32>
    %30 = arith.divf %26, %29 : vector<2x8xf32>
    %31 = vector.shape_cast %30 : vector<2x8xf32> to vector<2x8x1xf32>
    %32 = vector.broadcast %31 : vector<2x8x1xf32> to vector<2x8x32xf32>
    %33 = arith.mulf %9, %32 : vector<2x8x32xf32>
    %cst_10 = arith.constant dense<0.000000e+00> : vector<2x32xf32>
    %34 = vector.multi_reduction <add>, %33, %cst_10 [1] : vector<2x8x32xf32> to vector<2x32xf32>
    %c0_11 = arith.constant 0 : index
    %c0_12 = arith.constant 0 : index
    %35 = vector.load %arg2[%c0_11, %c0_12] : memref<2x32xf32, #tpu.memory_space<vmem>>, vector<2x32xf32>
    tpu.vector_store %arg2[%c0_11, %c0_12], %34 {strides = array<i32>} : memref<2x32xf32, #tpu.memory_space<vmem>>, vector<2x32xf32>,
    return
  }
}

</mosaic_0001>

<llo_original>
// kernel: meta_graph1_forward.1
$region0: #{meta_graph1_forward.1}
  #allocation0 [shape = 'u32[]', space=smem, size = 0x4, offset = 0x4, fixed_abs, tag = 'smem constant byte address 0x4 - core index']
  #allocation1 [shape = 'u32[144,128]{1,0:T(1,128)}', space=vmem, size = 0x12000, scoped, tag = 'internal scratch']
  %s0 = inlined_call_operand.vmem [shape: f32[2,8,32], index: 0, kind: input, shape index: {}]
  %s1 = inlined_call_operand.vmem [shape: f32[2,32], index: 1, kind: input, shape index: {}]
  %s2 = inlined_call_operand.hbm [shape: f32[2,32], index: 2, kind: output, shape index: {}]
  %s3 = sld [smem:[#allocation0]]
  $region18: #{meta_graph1_forward.1} parent=0
    _
  %s5 = ssub.s32 1, %s3
  %s6 = scalar_select 0, %s5, %s3
  $region1: #{meta_graph1_forward.1} parent=0
    #allocation2 [shape = 'u8[1024]{0}', space=vmem, size = 0x400, scoped, tag = 'output window, operand 0, single buffered']
    #allocation3 [shape = 's32[1]{0}', space=sflag, size = 0x4, scoped, tag = 'scoped memory for meta_graph1_forward.1']
    %7 = vsyncpa [#allocation3], 0
    // Predicated region
    $region2: #{meta_graph1_forward.1} parent=1 // pred_check
      _
    $region3: #{meta_graph1_forward.1} parent=1 // pred_check_branch
      %9 = sbr.rel (0) target = $region5
    $region4: #{meta_graph1_forward.1} parent=1 // pred_region
      _
    $region5: #{meta_graph1_forward.1} parent=1 // pred_fallthru
      _
    // Predicated region
    $region6: #{meta_graph1_forward.1} parent=1 // pred_check
      _
    $region7: #{meta_graph1_forward.1} parent=1 // pred_check_branch
      %11 = sbr.rel (0) target = $region9
    $region8: #{meta_graph1_forward.1} parent=1 // pred_region
      _
    $region9: #{meta_graph1_forward.1} parent=1 // pred_fallthru
      _
    %v12 = vld [vmem:[%s0] sm:$0xff]
    %v13 = vld [vmem:[%s0 + $0x8] sm:$0xff]
    %v14 = vld [vmem:[%s1] sm:$0x3]
    %v15 = vmul.f32 %v12, %v12
    %v16 = vmul.f32 %v13, %v13
    %vm17 = vcmask 261120
    %v18 = vsel %vm17, %v15, 0.0
    %19 = vadd.xlane.f32.xlu0 %v18
    %v20 = vpop.xlane.xlu0 %19
    %v21 = vsel %vm17, %v16, 0.0
    %22 = vadd.xlane.f32.xlu0 %v21
    %v23 = vpop.xlane.xlu0 %22
    %v24 = vrsqrt.pop %v20
    %v25 = vmul.f32 %v20, %v24
    %vm26 = vcmp.eq.f32.partialorder %v20, inf
    %v27 = vsel %vm26, %v20, %v25
    %vm28 = vcmp.eq.f32.partialorder %v20, 0.0
    %v29 = vand.u32 %v20, 2147483648
    %v30 = vsel %vm28, %v29, %v27
    %v31 = vrsqrt.pop %v23
    %v32 = vmul.f32 %v23, %v31
    %vm33 = vcmp.eq.f32.partialorder %v23, inf
    %v34 = vsel %vm33, %v23, %v32
    %vm35 = vcmp.eq.f32.partialorder %v23, 0.0
    %v36 = vand.u32 %v23, 2147483648
    %v37 = vsel %vm35, %v36, %v34
    %v38 = vmax.f32 %v30, 1e-12
    %v39 = vmax.f32 %v37, 1e-12
    %v40 = vrcp.pop %v38
    %v41 = vmul.f32 %v12, %v40
    %v42 = vrcp.pop %v39
    %v43 = vmul.f32 %v13, %v42
    %v44 = vmul.f32 %v14, %v14
    %vm45 = vcmask 254976
    %v46 = vsel %vm45, %v44, 0.0
    %47 = vadd.xlane.f32.xlu0 %v46
    %v48 = vpop.xlane.xlu0 %47
    %v49 = vrsqrt.pop %v48
    %v50 = vmul.f32 %v48, %v49
    %vm51 = vcmp.eq.f32.partialorder %v48, inf
    %v52 = vsel %vm51, %v48, %v50
    %vm53 = vcmp.eq.f32.partialorder %v48, 0.0
    %v54 = vand.u32 %v48, 2147483648
    %v55 = vsel %vm53, %v54, %v52
    %v56 = vmax.f32 %v55, 1e-12
    %v57 = vrcp.pop %v56
    %v58 = vmul.f32 %v14, %v57
    %v61 = vunpack.c.l.s4 1966171168
    %v62 = vunpack.c.0.s8 %v61
    %v63 = vlaneseq
    %v64 = vshrl.u32 %v63, 7
    %v65 = vsub.s32 %v62, %v64
    %v66 = vrot.slane %v58, %v65
    %v67 = vcombine.high %v66, %v66
    %v69 = vunpack.c.l.s4 1966171168
    %v70 = vunpack.c.0.s8 %v69
    %v71 = vlaneseq
    %v72 = vshrl.u32 %v71, 7
    %v73 = vsub.s32 %v70, %v72
    %v74 = vrot.slane %v66, %v73
    %v76 = vunpack.c.l.s4 1966171168
    %v77 = vunpack.c.0.s8 %v76
    %v78 = vlaneseq
    %v79 = vshrl.u32 %v78, 7
    %v80 = vsub.s32 %v77, %v79
    %v81 = vrot.slane %v67, %v80
    %v82 = vlaneseq
    %v83 = vshrl.u32 %v82, 7
    %v84 = vsub.s32 0, %v83
    %v85 = vrot.slane %v74, %v84
    %v86 = vlaneseq
    %v87 = vshrl.u32 %v86, 7
    %v88 = vsub.s32 0, %v87
    %v89 = vrot.slane %v81, %v88
    %v92 = vmul.f32 %v41, %v85
    %v93 = vmul.f32 %v43, %v89
    %v94 = vsel %vm17, %v92, 0.0
    %95 = vadd.xlane.f32.xlu0 %v94
    %v96 = vpop.xlane.xlu0 %95
    %v97 = vsel %vm17, %v93, 0.0
    %98 = vadd.xlane.f32.xlu0 %v97
    %v99 = vpop.xlane.xlu0 %98
    %v102 = vlaneseq
    %v103 = vand.u32 %v102, 127
    %v104 = vlaneseq
    %v105 = vshrl.u32 %v104, 7
    %v106 = vsub.s32 %v103, %v105
    %v107 = vrot.slane %v96, %v106
    %v108 = vlaneseq
    %v109 = vshrl.u32 %v108, 7
    %v110 = vsub.s32 %v103, %v109
    %v111 = vrot.slane %v99, %v110
    %vm112 = vcmask 1041409
    %v113 = vsel %vm112, %v111, %v107
    %vm115 = vcmask 58368
    %v116 = vsel %vm115, %v113, -inf
    %117 = vmax.xlane.f32.xlu0 %v116
    %v118 = vpop.xlane.xlu0 %117
    %v120 = vlaneseq
    %v121 = vshrl.u32 %v120, 7
    %v122 = vsub.s32 0, %v121
    %v123 = vrot.slane %v118, %v122
    %v124 = vlaneseq
    %v125 = vshrl.u32 %v124, 7
    %v126 = vsub.s32 1, %v125
    %v127 = vrot.slane %v118, %v126
    %v130 = vsub.f32 %v96, %v123
    %v131 = vsub.f32 %v99, %v127
    %v132 = vmul.f32 %v130, 1.442695
    %v133 = vpow.pop %v132
    %v134 = vmul.f32 %v131, 1.442695
    %v135 = vpow.pop %v134
    %138 = vset.pattern.permute.xlu0 0
    %139 = vperm.xlu0 %138, %v133
    %v140 = vpop.permute.xlu0 %139
    %141 = vset.pattern.permute.xlu0 0
    %142 = vperm.xlu0 %141, %v135
    %v143 = vpop.permute.xlu0 %142
    %v144 = vlaneseq
    %v145 = vshrl.u32 %v144, 7
    %v146 = vsub.s32 %v103, %v145
    %v147 = vrot.slane %v140, %v146
    %v148 = vlaneseq
    %v149 = vshrl.u32 %v148, 7
    %v150 = vsub.s32 %v103, %v149
    %v151 = vrot.slane %v143, %v150
    %v152 = vsel %vm112, %v151, %v147
    %v154 = vsel %vm115, %v152, 0.0
    %155 = vadd.xlane.f32.xlu0 %v154
    %v156 = vpop.xlane.xlu0 %155
    %v158 = vlaneseq
    %v159 = vshrl.u32 %v158, 7
    %v160 = vsub.s32 0, %v159
    %v161 = vrot.slane %v156, %v160
    %v162 = vlaneseq
    %v163 = vshrl.u32 %v162, 7
    %v164 = vsub.s32 1, %v163
    %v165 = vrot.slane %v156, %v164
    %v168 = vrcp.pop %v161
    %v169 = vmul.f32 %v133, %v168
    %v170 = vrcp.pop %v165
    %v171 = vmul.f32 %v135, %v170
    %173 = vset.pattern.permute.xlu0 0
    %174 = vperm.xlu0 %173, %v169
    %v175 = vpop.permute.xlu0 %174
    %178 = vset.pattern.permute.xlu0 0
    %179 = vperm.xlu0 %178, %v171
    %v180 = vpop.permute.xlu0 %179
    %v182 = vmul.f32 %v41, %v175
    %v183 = vmul.f32 %v43, %v180
    %v184 = vsel %vm17, %v182, 0.0
    %v185 = vrot.slane %v184, 4
    %v186 = vadd.f32 %v184, %v185
    %v187 = vrot.slane %v186, 2
    %v188 = vadd.f32 %v186, %v187
    %v189 = vrot.slane %v188, 1
    %v190 = vadd.f32 %v188, %v189
    %v191 = vsel %vm17, %v183, 0.0
    %v192 = vrot.slane %v191, 4
    %v193 = vadd.f32 %v191, %v192
    %v194 = vrot.slane %v193, 2
    %v195 = vadd.f32 %v193, %v194
    %v196 = vrot.slane %v195, 1
    %v197 = vadd.f32 %v195, %v196
    %v200 = vsel %vm112, %v197, %v190
    %202 = vst.msk [vmem:[#allocation2] sm:$0x3] %vm45, %v200
    // Predicated region
    $region10: #{meta_graph1_forward.1} parent=1 // pred_check
      _
    $region11: #{meta_graph1_forward.1} parent=1 // pred_check_branch
      %204 = sbr.rel (0) target = $region13
    $region12: #{meta_graph1_forward.1} parent=1 // pred_region
      %s206 = ssub.s32 32, 32
      %207 = vsyncadd [#allocation3], %s206
      %s209 = sshll.u32 [#allocation2], 4
      %s210 = int_to_ptr.vmem [resolvable:$true] %s209
      %212 = dma.vmem_to_hbm [thread:$0]  %s210, 32, %s2, [#allocation3]
    $region13: #{meta_graph1_forward.1} parent=1 // pred_fallthru
      _
    // Predicated region
    $region14: #{meta_graph1_forward.1} parent=1 // pred_check
      _
    $region15: #{meta_graph1_forward.1} parent=1 // pred_check_branch
      %214 = sbr.rel (0) target = $region17
    $region16: #{meta_graph1_forward.1} parent=1 // pred_region
      %215 = dma.done [#allocation3], 32
    $region17: #{meta_graph1_forward.1} parent=1 // pred_fallthru
      _
    %216 = vsyncpa [#allocation3], 1

</llo_original>
